<compile_context>
chip_gen: v5e
topology: v5e:2x2
jax: 0.10.0
libtpu: 0.0.40
codegen_flags: <defaults>
</compile_context>

<pallas_src>
import functools

import jax
import jax.numpy as jnp
from jax.experimental import pallas as pl
from jax.experimental.pallas import tpu as pltpu


def build_grid(resolution):
    """JAX equivalent of the PyTorch build_grid; returns [H, W, 4]."""
    ranges = [jnp.linspace(0.0, 1.0, num=res) for res in resolution]
    mesh = jnp.stack(jnp.meshgrid(*ranges, indexing="ij"), axis=-1)   # [H, W, 2]
    grid = jnp.reshape(mesh, (resolution[0], resolution[1], -1))      # [H, W, 2]
    return jnp.concatenate([grid, 1.0 - grid], axis=-1)               # [H, W, 4]


def _add_emb_kernel(x_ref, emb_ref, o_ref):
    # x_ref: (bt, Cd, tn); emb_ref: (Cd, tn) -> broadcasts over the batch dim.
    o_ref[...] = (x_ref[...] + emb_ref[...]).astype(o_ref.dtype)


def _target_block_bytes():
    """Chip-aware per-grid-step block-byte target (HBM-roofline driven)."""
    target = 2 << 20          # v5e/v6e: ~2 MiB amortizes the ~0.35 us/step overhead
    try:                      # and keeps worst-case VMEM under v5e's 16 MiB default.
        kind = jax.devices()[0].device_kind.lower()
        if "v7" in kind:      # v7x: ~3.2 TB/s HBM -> needs ~2x larger blocks;
            target = 4 << 20  # 2x(4+4+<=4) MiB double-buffered fits its 32 MiB scoped default.
    except Exception:
        pass
    return target


def _largest_divisor_leq(n, limit):
    """Largest divisor of n that is <= limit (always >= 1)."""
    if limit >= n:
        return n
    limit = max(1, limit)
    best = 1
    d = 1
    while d * d <= n:
        if n % d == 0:
            for cand in (d, n // d):
                if best < cand <= limit:
                    best = cand
        d += 1
    return best


def _choose_tiles(B, Cd, N, itemsize, target):
    """Pick (batch_tile, lane_tile) giving ~target-byte, lane-dense blocks."""
    # Lane-axis tile: full extent if the (Cd, N) slab fits the target; otherwise the
    # largest divisor of N within budget, preferring multiples of 128 (unmasked vst).
    if Cd * N * itemsize <= target:
        tn = N
    elif N % 128 == 0:
        units = N // 128
        unit_budget = max(1, target // (Cd * 128 * itemsize))
        tn = 128 * _largest_divisor_leq(units, unit_budget)
    else:
        tn = _largest_divisor_leq(N, max(1, target // (Cd * itemsize)))

    # Batch tile: pack batch elements up to the byte target (must divide B).
    block_bytes = Cd * tn * itemsize
    bt = _largest_divisor_leq(B, max(1, target // block_bytes))
    return bt, tn


@functools.partial(jax.jit, static_argnames=("resolution", "donate_input"))
def soft_position_embed(inputs, weight, bias, resolution, donate_input=False):
    """inputs: [B, C, H, W] (NCHW); weight: [C, 4]; bias: [C]."""
    B, C, H, W = inputs.shape
    assert (H, W) == tuple(resolution)
    HW = H * W
    itemsize = jnp.dtype(inputs.dtype).itemsize

    # Grid-invariant embedding, computed once outside the kernel (tiny XLA op):
    #   emb[C, HW] = W @ grid^T + b   (f32 math, then matched to the input dtype so the
    #   kernel streams half the bytes for bf16 activations).
    pos_grid = build_grid(resolution).reshape(HW, 4)                   # [HW, 4]
    emb = (weight.astype(jnp.float32) @ pos_grid.T.astype(jnp.float32)
           + bias.astype(jnp.float32)[:, None])                        # [C, HW] f32
    emb = emb.astype(inputs.dtype)

    # Layout: keep HW as the lane axis when it is already lane-dense; otherwise flatten
    # C*HW into a single lane axis so stores stay as unmasked as possible.
    if HW % 128 == 0 and HW >= 128:
        Cd, N = C, HW
        emb2 = emb                                                     # [C, HW]
    else:
        Cd, N = 1, C * HW
        emb2 = emb.reshape(Cd, N)                                      # [1, C*HW]
    x3 = inputs.reshape(B, Cd, N)

    target = _target_block_bytes()
    bt, tn = _choose_tiles(B, Cd, N, itemsize, target)

    # Grid order (hw, batch): emb's block index depends only on the outer hw axis, so
    # its copy is skipped across the inner batch loop (effectively VMEM-resident); when
    # tn == N it is DMA'd exactly once for the whole call.
    grid_dims = (N // tn, B // bt)

    out3 = pl.pallas_call(
        _add_emb_kernel,
        out_shape=jax.ShapeDtypeStruct((B, Cd, N), inputs.dtype),
        grid_spec=pltpu.PrefetchScalarGridSpec(
            num_scalar_prefetch=0,
            grid=grid_dims,
            in_specs=[
                pl.BlockSpec((bt, Cd, tn), lambda j, i: (i, 0, j)),    # streamed x
                pl.BlockSpec((Cd, tn), lambda j, i: (0, j)),           # resident emb
            ],
            out_specs=pl.BlockSpec((bt, Cd, tn), lambda j, i: (i, 0, j)),
        ),
        compiler_params=pltpu.CompilerParams(
            dimension_semantics=("parallel", "parallel")),
        # Aliasing x -> out saves the output HBM allocation when the caller donates x.
        input_output_aliases=({0: 0} if donate_input else {}),
    )(x3, emb2)

    return out3.reshape(B, C, H, W)


if __name__ == "__main__":
    # Small deterministic example consistent with the module's forward:
    # hidden_size (= channels) = 32, resolution = (16, 16), batch = 2.
    B, C, H, W = 2, 32, 16, 16
    resolution = (H, W)

    key = jax.random.PRNGKey(0)
    k_x, k_w, k_b = jax.random.split(key, 3)

    x = jax.random.normal(k_x, (B, C, H, W), dtype=jnp.float32)
    # nn.Linear(4, hidden) parameter shapes: weight [hidden, 4], bias [hidden].
    weight = jax.random.normal(k_w, (C, 4), dtype=jnp.float32) * 0.5
    bias = jax.random.normal(k_b, (C,), dtype=jnp.float32) * 0.1

    out = soft_position_embed(x, weight, bias, resolution=resolution)
    out = jax.block_until_ready(out)

    # Pure-JAX reference (mirrors the PyTorch forward exactly).
    grid_ref = build_grid(resolution)                         # [H, W, 4]
    emb_ref = grid_ref @ weight.T + bias                      # [H, W, C]
    emb_ref = jnp.transpose(emb_ref, (2, 0, 1))[None]         # [1, C, H, W]
    expected = x + emb_ref

    assert out.shape == (B, C, H, W)
    assert jnp.allclose(out, expected, atol=1e-5, rtol=1e-5), "mismatch vs reference"

    print("KERNEL_OK")
</pallas_src>

<mosaic_0001>
module attributes {stable_mosaic.version = 11 : i64} {
  func.func @_add_emb_kernel(%arg0: i32, %arg1: i32, %arg2: memref<2x32x256xf32, #tpu.memory_space<vmem>>, %arg3: memref<32x256xf32, #tpu.memory_space<vmem>>, %arg4: memref<2x32x256xf32, #tpu.memory_space<vmem>>) attributes {dimension_semantics = [#tpu.dimension_semantics<parallel>, #tpu.dimension_semantics<parallel>], iteration_bounds = array<i64: 1, 1>, scalar_prefetch = 0 : i64, scratch_operands = 0 : i64, tpu.core_type = #tpu.core_type<tc>, window_params = [{transform_indices = @transform_0, window_bounds = array<i64: 2, 32, 256>}, {transform_indices = @transform_1, window_bounds = array<i64: 32, 256>}, {transform_indices = @transform_2, window_bounds = array<i64: 2, 32, 256>}]} {
    %c0 = arith.constant 0 : index
    %c0_0 = arith.constant 0 : index
    %c0_1 = arith.constant 0 : index
    %0 = vector.load %arg2[%c0, %c0_0, %c0_1] : memref<2x32x256xf32, #tpu.memory_space<vmem>>, vector<2x32x256xf32>
    %c0_2 = arith.constant 0 : index
    %c0_3 = arith.constant 0 : index
    %1 = vector.load %arg3[%c0_2, %c0_3] : memref<32x256xf32, #tpu.memory_space<vmem>>, vector<32x256xf32>
    %2 = vector.shape_cast %1 : vector<32x256xf32> to vector<1x32x256xf32>
    %3 = vector.broadcast %2 : vector<1x32x256xf32> to vector<2x32x256xf32>
    %4 = arith.addf %0, %3 : vector<2x32x256xf32>
    %c0_4 = arith.constant 0 : index
    %c0_5 = arith.constant 0 : index
    %c0_6 = arith.constant 0 : index
    %5 = vector.load %arg4[%c0_4, %c0_5, %c0_6] : memref<2x32x256xf32, #tpu.memory_space<vmem>>, vector<2x32x256xf32>
    tpu.vector_store %arg4[%c0_4, %c0_5, %c0_6], %4 {strides = array<i32>} : memref<2x32x256xf32, #tpu.memory_space<vmem>>, vector<2x32x256xf32>,
    return
  }
  func.func @transform_0(%arg0: i32, %arg1: i32) -> (i32, i32, i32) {
    %c0_i32 = arith.constant 0 : i32
    %c0_i32_0 = arith.constant 0 : i32
    return %arg1, %c0_i32, %arg0 : i32, i32, i32
  }
  func.func @transform_1(%arg0: i32, %arg1: i32) -> (i32, i32) {
    %c0_i32 = arith.constant 0 : i32
    %c0_i32_0 = arith.constant 0 : i32
    return %c0_i32, %arg0 : i32, i32
  }
  func.func @transform_2(%arg0: i32, %arg1: i32) -> (i32, i32, i32) {
    %c0_i32 = arith.constant 0 : i32
    %c0_i32_0 = arith.constant 0 : i32
    return %arg1, %c0_i32, %arg0 : i32, i32, i32
  }
}

</mosaic_0001>

<llo_original>
// kernel: soft_position_embed.1
$region0: #{soft_position_embed.1}
  #allocation0 [shape = 'u32[]', space=smem, size = 0x4, offset = 0x4, fixed_abs, tag = 'smem constant byte address 0x4 - core index']
  #allocation1 [shape = 'u32[72,128]{1,0:T(1,128)}', space=vmem, size = 0x9000, scoped, tag = 'internal scratch']
  %s0 = inlined_call_operand.vmem [shape: f32[2,32,256], index: 0, kind: input, shape index: {}]
  %s1 = inlined_call_operand.vmem [shape: f32[32,256], index: 1, kind: input, shape index: {}]
  %s2 = inlined_call_operand.vmem [shape: f32[2,32,256], index: 2, kind: output, shape index: {}]
  %s3 = sld [smem:[#allocation0]]
  $region18: #{soft_position_embed.1} parent=0
    _
  %s5 = ssub.s32 1, %s3
  %s6 = scalar_select 0, %s5, %s3
  // Predicated region
  $region2: #{soft_position_embed.1} parent=0 // pred_check
    _
  $region3: #{soft_position_embed.1} parent=0 // pred_check_branch
    %8 = sbr.rel (0) target = $region5
  $region4: #{soft_position_embed.1} parent=0 // pred_region
    _
  $region5: #{soft_position_embed.1} parent=0 // pred_fallthru
    _
  // Predicated region
  $region6: #{soft_position_embed.1} parent=0 // pred_check
    _
  $region7: #{soft_position_embed.1} parent=0 // pred_check_branch
    %10 = sbr.rel (0) target = $region9
  $region8: #{soft_position_embed.1} parent=0 // pred_region
    _
  $region9: #{soft_position_embed.1} parent=0 // pred_fallthru
    _
  %v11 = vld [vmem:[%s0] sm:$0xff]
  %v12 = vld [vmem:[%s0 + $0x8] sm:$0xff]
  %v13 = vld [vmem:[%s0 + $0x10] sm:$0xff]
  %v14 = vld [vmem:[%s0 + $0x18] sm:$0xff]
  %v15 = vld [vmem:[%s0 + $0x20] sm:$0xff]
  %v16 = vld [vmem:[%s0 + $0x28] sm:$0xff]
  %v17 = vld [vmem:[%s0 + $0x30] sm:$0xff]
  %v18 = vld [vmem:[%s0 + $0x38] sm:$0xff]
  %v19 = vld [vmem:[%s0 + $0x40] sm:$0xff]
  %v20 = vld [vmem:[%s0 + $0x48] sm:$0xff]
  %v21 = vld [vmem:[%s0 + $0x50] sm:$0xff]
  %v22 = vld [vmem:[%s0 + $0x58] sm:$0xff]
  %v23 = vld [vmem:[%s0 + $0x60] sm:$0xff]
  %v24 = vld [vmem:[%s0 + $0x68] sm:$0xff]
  %v25 = vld [vmem:[%s0 + $0x70] sm:$0xff]
  %v26 = vld [vmem:[%s0 + $0x78] sm:$0xff]
  %v27 = vld [vmem:[%s1] sm:$0xff]
  %v28 = vld [vmem:[%s1 + $0x8] sm:$0xff]
  %v29 = vld [vmem:[%s1 + $0x10] sm:$0xff]
  %v30 = vld [vmem:[%s1 + $0x18] sm:$0xff]
  %v31 = vld [vmem:[%s1 + $0x20] sm:$0xff]
  %v32 = vld [vmem:[%s1 + $0x28] sm:$0xff]
  %v33 = vld [vmem:[%s1 + $0x30] sm:$0xff]
  %v34 = vld [vmem:[%s1 + $0x38] sm:$0xff]
  %v35 = vadd.f32 %v11, %v27
  %v36 = vadd.f32 %v12, %v28
  %v37 = vadd.f32 %v13, %v29
  %v38 = vadd.f32 %v14, %v30
  %v39 = vadd.f32 %v15, %v31
  %v40 = vadd.f32 %v16, %v32
  %v41 = vadd.f32 %v17, %v33
  %v42 = vadd.f32 %v18, %v34
  %v43 = vadd.f32 %v19, %v27
  %v44 = vadd.f32 %v20, %v28
  %v45 = vadd.f32 %v21, %v29
  %v46 = vadd.f32 %v22, %v30
  %v47 = vadd.f32 %v23, %v31
  %v48 = vadd.f32 %v24, %v32
  %v49 = vadd.f32 %v25, %v33
  %v50 = vadd.f32 %v26, %v34
  %51 = vst [vmem:[%s2] sm:$0xff] %v35
  %52 = vst [vmem:[%s2 + $0x8] sm:$0xff] %v36
  %53 = vst [vmem:[%s2 + $0x10] sm:$0xff] %v37
  %54 = vst [vmem:[%s2 + $0x18] sm:$0xff] %v38
  %55 = vst [vmem:[%s2 + $0x20] sm:$0xff] %v39
  %56 = vst [vmem:[%s2 + $0x28] sm:$0xff] %v40
  %57 = vst [vmem:[%s2 + $0x30] sm:$0xff] %v41
  %58 = vst [vmem:[%s2 + $0x38] sm:$0xff] %v42
  %59 = vst [vmem:[%s2 + $0x40] sm:$0xff] %v43
  %60 = vst [vmem:[%s2 + $0x48] sm:$0xff] %v44
  %61 = vst [vmem:[%s2 + $0x50] sm:$0xff] %v45
  %62 = vst [vmem:[%s2 + $0x58] sm:$0xff] %v46
  %63 = vst [vmem:[%s2 + $0x60] sm:$0xff] %v47
  %64 = vst [vmem:[%s2 + $0x68] sm:$0xff] %v48
  %65 = vst [vmem:[%s2 + $0x70] sm:$0xff] %v49
  %66 = vst [vmem:[%s2 + $0x78] sm:$0xff] %v50
  // Predicated region
  $region10: #{soft_position_embed.1} parent=0 // pred_check
    _
  $region11: #{soft_position_embed.1} parent=0 // pred_check_branch
    %68 = sbr.rel (0) target = $region13
  $region12: #{soft_position_embed.1} parent=0 // pred_region
    _
  $region13: #{soft_position_embed.1} parent=0 // pred_fallthru
    _
  // Predicated region
  $region14: #{soft_position_embed.1} parent=0 // pred_check
    _
  $region15: #{soft_position_embed.1} parent=0 // pred_check_branch
    %70 = sbr.rel (0) target = $region17
  $region16: #{soft_position_embed.1} parent=0 // pred_region
    _
  $region17: #{soft_position_embed.1} parent=0 // pred_fallthru
    _

</llo_original>
